<compile_context>
chip_gen: v7x
topology: tpu7x:2x2x1
jax: 0.10.0
libtpu: 0.0.40
codegen_flags: <defaults>
</compile_context>

<pallas_src>
import jax
import jax.numpy as jnp
from jax.experimental import pallas as pl
from jax.experimental.pallas import tpu as pltpu
import numpy as np

# ----------------------- module hyper-parameters -----------------------------
B = 2            # batch size
T = 8            # encoder time steps
V_DIM = 32       # encoder feature dim (v_dim)
Q_DIM = 32       # decoder state dim  (q_dim)
DIM = 32         # attention dim per head
NUM_HEAD = 2     # num_head (>1 so merge_head is used, matching the module)
TEMPERATURE = 0.5


# ------------------------------- kernel --------------------------------------
def _build_kernel(bs, ts, nh, dim, v_dim, inv_temp):
    """Returns the Pallas kernel body with all sizes baked in statically."""

    def kernel(dec_ref, enc_ref, len_ref,
               wq_ref, bq_ref, wkv_ref, bkv_ref, wm_ref, bm_ref,
               attn_ref, ctx_ref):
        # dec_ref : [B, Q]           decoder state
        # enc_ref : [B*T, V]         encoder features (time-flattened)
        # len_ref : [B, 1] int32     valid encoder lengths
        # wq_ref  : [Q, NH*DIM]           bq_ref : [1, NH*DIM]
        # wkv_ref : [V, NH*DIM + NH*V]    bkv_ref: [1, NH*DIM + NH*V]   (fused K|V)
        # wm_ref  : [NH, V, V]            bm_ref : [1, V]               (merge_head, per head)
        # attn_ref: [NH, B, T]       attention scores (head-major, T lane-dense)
        # ctx_ref : [B, V]           context vector
        dec = dec_ref[...]
        enc = enc_ref[...]

        # ---- projections: 2 MXU matmuls total ----
        # 1/temperature applied as ONE post-tanh multiply (cannot fold into wq).
        q = jnp.tanh(jnp.dot(dec, wq_ref[...],
                             preferred_element_type=jnp.float32) + bq_ref[...])
        q = q * inv_temp                                       # [B, NH*DIM]

        # Fused K/V projection: a single 128-lane-wide MXU result on the enc path.
        kv = jnp.tanh(jnp.dot(enc, wkv_ref[...],
                              preferred_element_type=jnp.float32) + bkv_ref[...])
        k3 = kv[:, :nh * dim].reshape(bs, ts, nh * dim)        # [B, T, NH*DIM]
        v3 = kv[:, nh * dim:].reshape(bs, ts, nh * v_dim)      # [B, T, NH*V]

        # ---- energy for all heads on the VPU: one shared broadcast-multiply ----
        prod = q[:, None, :] * k3                              # [B, T, NH*DIM]

        # length mask (shared across heads): position t valid iff t < enc_len[b]
        t_idx = jax.lax.broadcasted_iota(jnp.int32, (bs, ts), 1)   # [B, T]
        valid = t_idx < len_ref[...]                                # [B, T]

        ctx_acc = None
        for h in range(nh):                                    # static unroll (NH=2)
            # per-head energy: lane reduce of the shared q*k product (VPU/XLU, no MXU)
            e_h = jnp.sum(prod[:, :, h * dim:(h + 1) * dim], axis=-1)   # [B, T]
            e_h = jnp.where(valid, e_h, -1e30)

            # numerically-stable softmax over T; denominator on the EUP
            e_h = e_h - jnp.max(e_h, axis=-1, keepdims=True)
            p = jnp.exp(e_h)
            a_h = p * pl.reciprocal(jnp.sum(p, axis=-1, keepdims=True),
                                    approx=True)                        # [B, T]

            # direct per-head store (no concatenate); T stays the lane dim
            attn_ref[h] = a_h.astype(attn_ref.dtype)

            # context: attention-weighted sum over T (tiny batched MXU einsum,
            # same op class that was already validated to lower cleanly).
            v_h = v3[:, :, h * v_dim:(h + 1) * v_dim]                   # [B, T, V]
            ctx_h = jnp.einsum('bqt,btv->bqv', a_h[:, None, :], v_h,
                               preferred_element_type=jnp.float32)[:, 0, :]  # [B, V]

            # merge_head: accumulate per-head contribution against the matching
            # head slice of the merge weight (leading-axis ref index is free).
            contrib = jnp.dot(ctx_h, wm_ref[h],
                              preferred_element_type=jnp.float32)       # [B, V]
            ctx_acc = contrib if ctx_acc is None else ctx_acc + contrib

        ctx_ref[...] = (ctx_acc + bm_ref[...]).astype(ctx_ref.dtype)

    return kernel


# ------------------------------ wrapper ---------------------------------------
def attention_forward(dec_state, enc_feat, enc_len, params):
    bs, ts, v_dim = enc_feat.shape
    nh, dim = NUM_HEAD, DIM
    inv_temp = 1.0 / TEMPERATURE

    enc_flat = enc_feat.reshape(bs * ts, v_dim)
    enc_len2 = enc_len.reshape(bs, 1).astype(jnp.int32)

    # PyTorch Linear stores weight as [out, in]; pre-transpose to [in, out] and
    # fuse the K / V projection weights column-wise (pure XLA glue, done once
    # per call and fused by jit).
    wq = params['wq'].T                                            # [Q, NH*DIM]
    bq = params['bq'].reshape(1, -1)
    wkv = jnp.concatenate([params['wk'].T, params['wv'].T], axis=1)  # [V, NH*(DIM+V)]
    bkv = jnp.concatenate([params['bk'], params['bv']]).reshape(1, -1)
    wm_h = params['wm'].T.reshape(nh, v_dim, v_dim)                # [NH, V, V]
    bm = params['bm'].reshape(1, -1)

    kernel = _build_kernel(bs, ts, nh, dim, v_dim, inv_temp)
    vmem = pl.BlockSpec(memory_space=pltpu.MemorySpace.VMEM)

    attn_hbt, ctx = pl.pallas_call(
        kernel,
        out_shape=(
            jax.ShapeDtypeStruct((nh, bs, ts), jnp.float32),   # head-major, T last
            jax.ShapeDtypeStruct((bs, v_dim), jnp.float32),    # context vector
        ),
        in_specs=[vmem] * 9,
        out_specs=(vmem, vmem),
    )(dec_state, enc_flat, enc_len2, wq, bq, wkv, bkv, wm_h, bm)

    attn = jnp.transpose(attn_hbt, (1, 0, 2))                  # [B, NH, T] (free glue)
    return attn, ctx


attention_forward_jit = jax.jit(attention_forward)


# --------------------------- reference (plain JAX) -----------------------------
def attention_reference(dec_state, enc_feat, enc_len, params):
    bs, ts, _ = enc_feat.shape
    q = jnp.tanh(dec_state @ params['wq'].T + params['bq'])
    q = q.reshape(bs * NUM_HEAD, DIM)
    k = jnp.tanh(enc_feat @ params['wk'].T + params['bk'])
    v = jnp.tanh(enc_feat @ params['wv'].T + params['bv'])
    k = k.reshape(bs, ts, NUM_HEAD, DIM).transpose(0, 2, 1, 3).reshape(bs * NUM_HEAD, ts, DIM)
    v = v.reshape(bs, ts, NUM_HEAD, V_DIM).transpose(0, 2, 1, 3).reshape(bs * NUM_HEAD, ts, V_DIM)

    energy = jnp.einsum('bd,btd->bt', q, k) / TEMPERATURE
    mask = jnp.broadcast_to(jnp.arange(ts)[None, None, :] >= enc_len[:, None, None],
                            (bs, NUM_HEAD, ts)).reshape(bs * NUM_HEAD, ts)
    energy = jnp.where(mask, -1e30, energy)
    attn = jax.nn.softmax(energy, axis=-1)
    ctx = jnp.einsum('bt,btv->bv', attn, v)                    # [bs*nh, v_dim]
    attn = attn.reshape(bs, NUM_HEAD, ts)
    ctx = ctx.reshape(bs, NUM_HEAD * V_DIM) @ params['wm'].T + params['bm']
    return attn, ctx


# -------------------------------- main -----------------------------------------
if __name__ == "__main__":
    key = jax.random.PRNGKey(0)
    ks = jax.random.split(key, 12)

    # deterministic synthetic parameters (PyTorch Linear shapes: weight [out, in])
    params = {
        'wq': jax.random.normal(ks[0], (DIM * NUM_HEAD, Q_DIM), jnp.float32) * 0.1,
        'bq': jax.random.normal(ks[1], (DIM * NUM_HEAD,), jnp.float32) * 0.01,
        'wk': jax.random.normal(ks[2], (DIM * NUM_HEAD, V_DIM), jnp.float32) * 0.1,
        'bk': jax.random.normal(ks[3], (DIM * NUM_HEAD,), jnp.float32) * 0.01,
        'wv': jax.random.normal(ks[4], (V_DIM * NUM_HEAD, V_DIM), jnp.float32) * 0.1,
        'bv': jax.random.normal(ks[5], (V_DIM * NUM_HEAD,), jnp.float32) * 0.01,
        'wm': jax.random.normal(ks[6], (V_DIM, V_DIM * NUM_HEAD), jnp.float32) * 0.1,
        'bm': jax.random.normal(ks[7], (V_DIM,), jnp.float32) * 0.01,
    }

    dec_state = jax.random.normal(ks[8], (B, Q_DIM), jnp.float32)
    enc_feat = jax.random.normal(ks[9], (B, T, V_DIM), jnp.float32)
    enc_len = jnp.array([T, 5], dtype=jnp.int32)

    attn, ctx = attention_forward_jit(dec_state, enc_feat, enc_len, params)
    jax.block_until_ready((attn, ctx))

    attn_ref, ctx_ref = attention_reference(dec_state, enc_feat, enc_len, params)
    assert attn.shape == (B, NUM_HEAD, T) and ctx.shape == (B, V_DIM)
    # tolerance covers the EUP approximate reciprocal used for the softmax denominator
    np.testing.assert_allclose(np.asarray(attn), np.asarray(attn_ref), atol=2e-3, rtol=2e-3)
    np.testing.assert_allclose(np.asarray(ctx), np.asarray(ctx_ref), atol=2e-3, rtol=2e-3)

    print("KERNEL_OK")
</pallas_src>

<mosaic_0001>
module attributes {stable_mosaic.version = 11 : i64} {
  func.func @kernel(%arg0: memref<2x32xf32, #tpu.memory_space<vmem>>, %arg1: memref<16x32xf32, #tpu.memory_space<vmem>>, %arg2: memref<2x1xi32, #tpu.memory_space<vmem>>, %arg3: memref<32x64xf32, #tpu.memory_space<vmem>>, %arg4: memref<1x64xf32, #tpu.memory_space<vmem>>, %arg5: memref<32x128xf32, #tpu.memory_space<vmem>>, %arg6: memref<1x128xf32, #tpu.memory_space<vmem>>, %arg7: memref<2x32x32xf32, #tpu.memory_space<vmem>>, %arg8: memref<1x32xf32, #tpu.memory_space<vmem>>, %arg9: memref<2x2x8xf32, #tpu.memory_space<vmem>>, %arg10: memref<2x32xf32, #tpu.memory_space<vmem>>) attributes {dimension_semantics = [], scalar_prefetch = 0 : i64, scratch_operands = 0 : i64, tpu.core_type = #tpu.core_type<tc>} {
    %c0 = arith.constant 0 : index
    %c0_0 = arith.constant 0 : index
    %0 = vector.load %arg0[%c0, %c0_0] : memref<2x32xf32, #tpu.memory_space<vmem>>, vector<2x32xf32>
    %c0_1 = arith.constant 0 : index
    %c0_2 = arith.constant 0 : index
    %1 = vector.load %arg1[%c0_1, %c0_2] : memref<16x32xf32, #tpu.memory_space<vmem>>, vector<16x32xf32>
    %c0_3 = arith.constant 0 : index
    %c0_4 = arith.constant 0 : index
    %2 = vector.load %arg3[%c0_3, %c0_4] : memref<32x64xf32, #tpu.memory_space<vmem>>, vector<32x64xf32>
    %cst = arith.constant dense<0.000000e+00> : vector<2x64xf32>
    %3 = tpu.matmul %0, %2, %cst {dimension_numbers = #tpu.dot_dimension_numbers<[1], [0], [0], [1], [0, 0, 1, 1], [], []>} : vector<2x32xf32>, vector<32x64xf32>, vector<2x64xf32> -> vector<2x64xf32>
    %c0_5 = arith.constant 0 : index
    %c0_6 = arith.constant 0 : index
    %4 = vector.load %arg4[%c0_5, %c0_6] : memref<1x64xf32, #tpu.memory_space<vmem>>, vector<1x64xf32>
    %5 = vector.broadcast %4 : vector<1x64xf32> to vector<2x64xf32>
    %6 = arith.addf %3, %5 : vector<2x64xf32>
    %7 = math.tanh %6 : vector<2x64xf32>
    %cst_7 = arith.constant 2.000000e+00 : f32
    %8 = vector.broadcast %cst_7 : f32 to vector<2x64xf32>
    %9 = arith.mulf %7, %8 : vector<2x64xf32>
    %c0_8 = arith.constant 0 : index
    %c0_9 = arith.constant 0 : index
    %10 = vector.load %arg5[%c0_8, %c0_9] : memref<32x128xf32, #tpu.memory_space<vmem>>, vector<32x128xf32>
    %cst_10 = arith.constant dense<0.000000e+00> : vector<16x128xf32>
    %11 = tpu.matmul %1, %10, %cst_10 {dimension_numbers = #tpu.dot_dimension_numbers<[1], [0], [0], [1], [0, 0, 1, 1], [], []>} : vector<16x32xf32>, vector<32x128xf32>, vector<16x128xf32> -> vector<16x128xf32>
    %c0_11 = arith.constant 0 : index
    %c0_12 = arith.constant 0 : index
    %12 = vector.load %arg6[%c0_11, %c0_12] : memref<1x128xf32, #tpu.memory_space<vmem>>, vector<1x128xf32>
    %13 = vector.broadcast %12 : vector<1x128xf32> to vector<16x128xf32>
    %14 = arith.addf %11, %13 : vector<16x128xf32>
    %15 = math.tanh %14 : vector<16x128xf32>
    %16 = vector.extract_strided_slice %15 {offsets = [0, 0], sizes = [16, 64], strides = [1, 1]} : vector<16x128xf32> to vector<16x64xf32>
    %17 = vector.shape_cast %16 : vector<16x64xf32> to vector<2x8x64xf32>
    %18 = vector.extract_strided_slice %15 {offsets = [0, 64], sizes = [16, 64], strides = [1, 1]} : vector<16x128xf32> to vector<16x64xf32>
    %19 = vector.shape_cast %18 : vector<16x64xf32> to vector<2x8x64xf32>
    %20 = vector.shape_cast %9 : vector<2x64xf32> to vector<2x1x64xf32>
    %21 = vector.broadcast %20 : vector<2x1x64xf32> to vector<2x8x64xf32>
    %22 = arith.mulf %21, %17 : vector<2x8x64xf32>
    %23 = tpu.iota {dimensions = array<i32: 1>} : vector<2x8xi32>
    %c0_13 = arith.constant 0 : index
    %c0_14 = arith.constant 0 : index
    %24 = vector.load %arg2[%c0_13, %c0_14] : memref<2x1xi32, #tpu.memory_space<vmem>>, vector<2x1xi32>
    %25 = vector.broadcast %24 : vector<2x1xi32> to vector<2x8xi32>
    %26 = arith.cmpi slt, %23, %25 : vector<2x8xi32>
    %27 = vector.extract_strided_slice %22 {offsets = [0, 0, 0], sizes = [2, 8, 32], strides = [1, 1, 1]} : vector<2x8x64xf32> to vector<2x8x32xf32>
    %cst_15 = arith.constant dense<0.000000e+00> : vector<2x8xf32>
    %28 = vector.multi_reduction <add>, %27, %cst_15 [2] : vector<2x8x32xf32> to vector<2x8xf32>
    %cst_16 = arith.constant -1.000000e+30 : f32
    %29 = vector.broadcast %cst_16 : f32 to vector<2x8xf32>
    %30 = arith.select %26, %28, %29 : vector<2x8xi1>, vector<2x8xf32>
    %cst_17 = arith.constant dense<0xFF800000> : vector<2xf32>
    %31 = vector.multi_reduction <maximumf>, %30, %cst_17 [1] : vector<2x8xf32> to vector<2xf32>
    %32 = vector.shape_cast %31 : vector<2xf32> to vector<2x1xf32>
    %33 = vector.broadcast %32 : vector<2x1xf32> to vector<2x8xf32>
    %34 = arith.subf %30, %33 : vector<2x8xf32>
    %35 = math.exp %34 : vector<2x8xf32>
    %cst_18 = arith.constant dense<0.000000e+00> : vector<2xf32>
    %36 = vector.multi_reduction <add>, %35, %cst_18 [1] : vector<2x8xf32> to vector<2xf32>
    %37 = vector.shape_cast %36 : vector<2xf32> to vector<2x1xf32>
    %38 = tpu.reciprocal %37 {approx = true} : vector<2x1xf32> -> vector<2x1xf32>
    %39 = vector.broadcast %38 : vector<2x1xf32> to vector<2x8xf32>
    %40 = arith.mulf %35, %39 : vector<2x8xf32>
    %c0_19 = arith.constant 0 : index
    %c0_20 = arith.constant 0 : index
    %c0_21 = arith.constant 0 : index
    %41 = vector.load %arg9[%c0_19, %c0_20, %c0_21] : memref<2x2x8xf32, #tpu.memory_space<vmem>>, vector<1x2x8xf32>
    %42 = vector.shape_cast %41 : vector<1x2x8xf32> to vector<2x8xf32>
    %43 = vector.shape_cast %40 : vector<2x8xf32> to vector<1x2x8xf32>
    tpu.vector_store %arg9[%c0_19, %c0_20, %c0_21], %43 {strides = array<i32>} : memref<2x2x8xf32, #tpu.memory_space<vmem>>, vector<1x2x8xf32>,
    %44 = vector.extract_strided_slice %19 {offsets = [0, 0, 0], sizes = [2, 8, 32], strides = [1, 1, 1]} : vector<2x8x64xf32> to vector<2x8x32xf32>
    %45 = vector.shape_cast %40 : vector<2x8xf32> to vector<2x1x8xf32>
    "tpu.trace_start"() <{level = 10 : i32, message = "bqt,btv->bqv"}> : () -> ()
    %cst_22 = arith.constant dense<0.000000e+00> : vector<2x1x32xf32>
    %46 = tpu.matmul %45, %44, %cst_22 {dimension_numbers = #tpu.dot_dimension_numbers<[2], [1], [1], [2], [0, 0, 0, 1, 1, 2], [0], [0]>} : vector<2x1x8xf32>, vector<2x8x32xf32>, vector<2x1x32xf32> -> vector<2x1x32xf32>
    "tpu.trace_stop"() : () -> ()
    %47 = vector.shape_cast %46 : vector<2x1x32xf32> to vector<2x32xf32>
    %c0_23 = arith.constant 0 : index
    %c0_24 = arith.constant 0 : index
    %c0_25 = arith.constant 0 : index
    %48 = vector.load %arg7[%c0_23, %c0_24, %c0_25] : memref<2x32x32xf32, #tpu.memory_space<vmem>>, vector<1x32x32xf32>
    %49 = vector.shape_cast %48 : vector<1x32x32xf32> to vector<32x32xf32>
    %cst_26 = arith.constant dense<0.000000e+00> : vector<2x32xf32>
    %50 = tpu.matmul %47, %49, %cst_26 {dimension_numbers = #tpu.dot_dimension_numbers<[1], [0], [0], [1], [0, 0, 1, 1], [], []>} : vector<2x32xf32>, vector<32x32xf32>, vector<2x32xf32> -> vector<2x32xf32>
    %51 = vector.extract_strided_slice %22 {offsets = [0, 0, 32], sizes = [2, 8, 32], strides = [1, 1, 1]} : vector<2x8x64xf32> to vector<2x8x32xf32>
    %cst_27 = arith.constant dense<0.000000e+00> : vector<2x8xf32>
    %52 = vector.multi_reduction <add>, %51, %cst_27 [2] : vector<2x8x32xf32> to vector<2x8xf32>
    %cst_28 = arith.constant -1.000000e+30 : f32
    %53 = vector.broadcast %cst_28 : f32 to vector<2x8xf32>
    %54 = arith.select %26, %52, %53 : vector<2x8xi1>, vector<2x8xf32>
    %cst_29 = arith.constant dense<0xFF800000> : vector<2xf32>
    %55 = vector.multi_reduction <maximumf>, %54, %cst_29 [1] : vector<2x8xf32> to vector<2xf32>
    %56 = vector.shape_cast %55 : vector<2xf32> to vector<2x1xf32>
    %57 = vector.broadcast %56 : vector<2x1xf32> to vector<2x8xf32>
    %58 = arith.subf %54, %57 : vector<2x8xf32>
    %59 = math.exp %58 : vector<2x8xf32>
    %cst_30 = arith.constant dense<0.000000e+00> : vector<2xf32>
    %60 = vector.multi_reduction <add>, %59, %cst_30 [1] : vector<2x8xf32> to vector<2xf32>
    %61 = vector.shape_cast %60 : vector<2xf32> to vector<2x1xf32>
    %62 = tpu.reciprocal %61 {approx = true} : vector<2x1xf32> -> vector<2x1xf32>
    %63 = vector.broadcast %62 : vector<2x1xf32> to vector<2x8xf32>
    %64 = arith.mulf %59, %63 : vector<2x8xf32>
    %c1 = arith.constant 1 : index
    %c0_31 = arith.constant 0 : index
    %c0_32 = arith.constant 0 : index
    %65 = vector.load %arg9[%c1, %c0_31, %c0_32] : memref<2x2x8xf32, #tpu.memory_space<vmem>>, vector<1x2x8xf32>
    %66 = vector.shape_cast %65 : vector<1x2x8xf32> to vector<2x8xf32>
    %67 = vector.shape_cast %64 : vector<2x8xf32> to vector<1x2x8xf32>
    tpu.vector_store %arg9[%c1, %c0_31, %c0_32], %67 {strides = array<i32>} : memref<2x2x8xf32, #tpu.memory_space<vmem>>, vector<1x2x8xf32>,
    %68 = vector.extract_strided_slice %19 {offsets = [0, 0, 32], sizes = [2, 8, 32], strides = [1, 1, 1]} : vector<2x8x64xf32> to vector<2x8x32xf32>
    %69 = vector.shape_cast %64 : vector<2x8xf32> to vector<2x1x8xf32>
    "tpu.trace_start"() <{level = 10 : i32, message = "bqt,btv->bqv"}> : () -> ()
    %cst_33 = arith.constant dense<0.000000e+00> : vector<2x1x32xf32>
    %70 = tpu.matmul %69, %68, %cst_33 {dimension_numbers = #tpu.dot_dimension_numbers<[2], [1], [1], [2], [0, 0, 0, 1, 1, 2], [0], [0]>} : vector<2x1x8xf32>, vector<2x8x32xf32>, vector<2x1x32xf32> -> vector<2x1x32xf32>
    "tpu.trace_stop"() : () -> ()
    %71 = vector.shape_cast %70 : vector<2x1x32xf32> to vector<2x32xf32>
    %c1_34 = arith.constant 1 : index
    %c0_35 = arith.constant 0 : index
    %c0_36 = arith.constant 0 : index
    %72 = vector.load %arg7[%c1_34, %c0_35, %c0_36] : memref<2x32x32xf32, #tpu.memory_space<vmem>>, vector<1x32x32xf32>
    %73 = vector.shape_cast %72 : vector<1x32x32xf32> to vector<32x32xf32>
    %cst_37 = arith.constant dense<0.000000e+00> : vector<2x32xf32>
    %74 = tpu.matmul %71, %73, %cst_37 {dimension_numbers = #tpu.dot_dimension_numbers<[1], [0], [0], [1], [0, 0, 1, 1], [], []>} : vector<2x32xf32>, vector<32x32xf32>, vector<2x32xf32> -> vector<2x32xf32>
    %75 = arith.addf %50, %74 : vector<2x32xf32>
    %c0_38 = arith.constant 0 : index
    %c0_39 = arith.constant 0 : index
    %76 = vector.load %arg8[%c0_38, %c0_39] : memref<1x32xf32, #tpu.memory_space<vmem>>, vector<1x32xf32>
    %77 = vector.broadcast %76 : vector<1x32xf32> to vector<2x32xf32>
    %78 = arith.addf %75, %77 : vector<2x32xf32>
    %c0_40 = arith.constant 0 : index
    %c0_41 = arith.constant 0 : index
    %79 = vector.load %arg10[%c0_40, %c0_41] : memref<2x32xf32, #tpu.memory_space<vmem>>, vector<2x32xf32>
    tpu.vector_store %arg10[%c0_40, %c0_41], %78 {strides = array<i32>} : memref<2x32xf32, #tpu.memory_space<vmem>>, vector<2x32xf32>,
    return
  }
}

</mosaic_0001>

<llo_original>
// kernel: attention_forward.1
$region0: #{attention_forward.1}
  #allocation0 [shape = 'u32[]', space=smem, size = 0x4, offset = 0x4, fixed_abs, tag = 'smem constant byte address 0x4 - core index']
  #allocation1 [shape = 'u32[144,128]{1,0:T(1,128)}', space=vmem, size = 0x12000, scoped, tag = 'internal scratch']
  %s0 = inlined_call_operand.vmem [shape: f32[2,32], index: 0, kind: input, shape index: {}]
  %s1 = inlined_call_operand.vmem [shape: f32[16,32], index: 1, kind: input, shape index: {}]
  %s2 = inlined_call_operand.vmem [shape: s32[2,1], index: 2, kind: input, shape index: {}]
  %s3 = inlined_call_operand.vmem [shape: f32[32,64], index: 3, kind: input, shape index: {}]
  %s4 = inlined_call_operand.vmem [shape: f32[1,64], index: 4, kind: input, shape index: {}]
  %s5 = inlined_call_operand.vmem [shape: f32[32,128], index: 5, kind: input, shape index: {}]
  %s6 = inlined_call_operand.vmem [shape: f32[1,128], index: 6, kind: input, shape index: {}]
  %s7 = inlined_call_operand.vmem [shape: f32[2,32,32], index: 7, kind: input, shape index: {}]
  %s8 = inlined_call_operand.vmem [shape: f32[1,32], index: 8, kind: input, shape index: {}]
  %s9 = inlined_call_operand.vmem [shape: f32[2,2,8], index: 9, kind: output, shape index: {0}]
  %s10 = inlined_call_operand.hbm [shape: f32[2,32], index: 10, kind: output, shape index: {1}]
  %11 = xla_tuple %s9, %s10
  %s12 = sld [smem:[#allocation0]]
  $region54: #{attention_forward.1} parent=0
    _
  %s14 = ssub.s32 1, %s12
  %s15 = scalar_select 0, %s14, %s12
  $region1: #{attention_forward.1} parent=0
    #allocation2 [shape = 'u8[1024]{0}', space=vmem, size = 0x400, scoped, tag = 'output window, operand 1, single buffered']
    #allocation3 [shape = 's32[1]{0}', space=sflag, size = 0x4, scoped, tag = 'scoped memory for attention_forward.1']
    %16 = vsyncpa [#allocation3], 0
    // Predicated region
    $region2: #{attention_forward.1} parent=1 // pred_check
      _
    $region3: #{attention_forward.1} parent=1 // pred_check_branch
      %18 = sbr.rel (0) target = $region5
    $region4: #{attention_forward.1} parent=1 // pred_region
      _
    $region5: #{attention_forward.1} parent=1 // pred_fallthru
      _
    // Predicated region
    $region6: #{attention_forward.1} parent=1 // pred_check
      _
    $region7: #{attention_forward.1} parent=1 // pred_check_branch
      %20 = sbr.rel (0) target = $region9
    $region8: #{attention_forward.1} parent=1 // pred_region
      _
    $region9: #{attention_forward.1} parent=1 // pred_fallthru
      _
    // Predicated region
    $region10: #{attention_forward.1} parent=1 // pred_check
      _
    $region11: #{attention_forward.1} parent=1 // pred_check_branch
      %22 = sbr.rel (0) target = $region13
    $region12: #{attention_forward.1} parent=1 // pred_region
      _
    $region13: #{attention_forward.1} parent=1 // pred_fallthru
      _
    // Predicated region
    $region14: #{attention_forward.1} parent=1 // pred_check
      _
    $region15: #{attention_forward.1} parent=1 // pred_check_branch
      %24 = sbr.rel (0) target = $region17
    $region16: #{attention_forward.1} parent=1 // pred_region
      _
    $region17: #{attention_forward.1} parent=1 // pred_fallthru
      _
    // Predicated region
    $region18: #{attention_forward.1} parent=1 // pred_check
      _
    $region19: #{attention_forward.1} parent=1 // pred_check_branch
      %26 = sbr.rel (0) target = $region21
    $region20: #{attention_forward.1} parent=1 // pred_region
      _
    $region21: #{attention_forward.1} parent=1 // pred_fallthru
      _
    // Predicated region
    $region22: #{attention_forward.1} parent=1 // pred_check
      _
    $region23: #{attention_forward.1} parent=1 // pred_check_branch
      %28 = sbr.rel (0) target = $region25
    $region24: #{attention_forward.1} parent=1 // pred_region
      _
    $region25: #{attention_forward.1} parent=1 // pred_fallthru
      _
    // Predicated region
    $region26: #{attention_forward.1} parent=1 // pred_check
      _
    $region27: #{attention_forward.1} parent=1 // pred_check_branch
      %30 = sbr.rel (0) target = $region29
    $region28: #{attention_forward.1} parent=1 // pred_region
      _
    $region29: #{attention_forward.1} parent=1 // pred_fallthru
      _
    // Predicated region
    $region30: #{attention_forward.1} parent=1 // pred_check
      _
    $region31: #{attention_forward.1} parent=1 // pred_check_branch
      %32 = sbr.rel (0) target = $region33
    $region32: #{attention_forward.1} parent=1 // pred_region
      _
    $region33: #{attention_forward.1} parent=1 // pred_fallthru
      _
    // Predicated region
    $region34: #{attention_forward.1} parent=1 // pred_check
      _
    $region35: #{attention_forward.1} parent=1 // pred_check_branch
      %34 = sbr.rel (0) target = $region37
    $region36: #{attention_forward.1} parent=1 // pred_region
      _
    $region37: #{attention_forward.1} parent=1 // pred_fallthru
      _
    %v35 = vld [vmem:[%s0] sm:$0x3]
    %v36 = vld [vmem:[%s1] sm:$0xff]
    %v37 = vld [vmem:[%s1 + $0x8] sm:$0xff]
    %v38 = vld [vmem:[%s3] sm:$0xff]
    %v39 = vld [vmem:[%s3 + $0x8] sm:$0xff]
    %v40 = vld [vmem:[%s3 + $0x10] sm:$0xff]
    %v41 = vld [vmem:[%s3 + $0x18] sm:$0xff]
    %v42 = vld [vmem:[%s4] sm:$0x1]
    %v44 = vlaneseq
    %v45 = vshrl.u32 %v44, 7
    %v46 = vsub.s32 0, %v45
    %v47 = vrot.slane %v42, %v46
    %vm49 = vcmask 261120
    %v51 = vsel %vm49, %v35, 0
    %53 = vmatprep.subr.mxu0 0.0
    %54 = vmatpush1.msra.mxu0 %v38
    %55 = vmatprep.subr.mxu0 0.0
    %56 = vmatpush1.msra.mxu0 %v39
    %57 = vmatprep.subr.mxu0 0.0
    %58 = vmatpush1.msra.mxu0 %v40
    %59 = vmatprep.subr.mxu0 0.0
    %60 = vmatpush1.msra.mxu0 %v41
    %61 = vmatprep.subr.mxu0 0.0
    %62 = vmatpush1.msra.mxu0 0.0
    %63 = vmatprep.subr.mxu0 0.0
    %64 = vmatpush1.msra.mxu0 0.0
    %65 = vmatprep.subr.mxu0 0.0
    %66 = vmatpush1.msra.mxu0 0.0
    %67 = vmatprep.subr.mxu0 0.0
    %68 = vmatpush1.msra.mxu0 0.0
    %69 = vmatprep.subr.mxu0 0.0
    %70 = vmatpush1.msra.mxu0 0.0
    %71 = vmatprep.subr.mxu0 0.0
    %72 = vmatpush1.msra.mxu0 0.0
    %73 = vmatprep.subr.mxu0 0.0
    %74 = vmatpush1.msra.mxu0 0.0
    %75 = vmatprep.subr.mxu0 0.0
    %76 = vmatpush1.msra.mxu0 0.0
    %77 = vmatprep.subr.mxu0 0.0
    %78 = vmatpush1.msra.mxu0 0.0
    %79 = vmatprep.subr.mxu0 0.0
    %80 = vmatpush1.msra.mxu0 0.0
    %81 = vmatprep.subr.mxu0 0.0
    %82 = vmatpush1.msra.mxu0 0.0
    %83 = vmatprep.subr.mxu0 0.0
    %84 = vmatpush1.msra.mxu0 0.0
    %85 = vmatprep.subr.mxu0 0.0
    %86 = vmatpush1.msra.mxu0 0.0
    %87 = vmatprep.subr.mxu0 0.0
    %88 = vmatpush1.msra.mxu0 0.0
    %89 = vmatprep.subr.mxu0 0.0
    %90 = vmatpush1.msra.mxu0 0.0
    %91 = vmatprep.subr.mxu0 0.0
    %92 = vmatpush1.msra.mxu0 0.0
    %93 = vmatprep.subr.mxu0 0.0
    %94 = vmatpush1.msra.mxu0 0.0
    %95 = vmatprep.subr.mxu0 0.0
    %96 = vmatpush1.msra.mxu0 0.0
    %97 = vmatprep.subr.mxu0 0.0
    %98 = vmatpush1.msra.mxu0 0.0
    %99 = vmatprep.subr.mxu0 0.0
    %100 = vmatpush1.msra.mxu0 0.0
    %101 = vmatprep.subr.mxu0 0.0
    %102 = vmatpush1.msra.mxu0 0.0
    %103 = vmatprep.subr.mxu0 0.0
    %104 = vmatpush1.msra.mxu0 0.0
    %105 = vmatprep.subr.mxu0 0.0
    %106 = vmatpush1.msra.mxu0 0.0
    %107 = vmatprep.subr.mxu0 0.0
    %108 = vmatpush1.msra.mxu0 0.0
    %109 = vmatprep.subr.mxu0 0.0
    %110 = vmatpush1.msra.mxu0 0.0
    %111 = vmatprep.subr.mxu0 0.0
    %112 = vmatpush1.msra.mxu0 0.0
    %113 = vmatprep.subr.mxu0 0.0
    %114 = vmatpush1.msra.mxu0 0.0
    %115 = vmatprep.subr.mxu0 0.0
    %116 = vmatpush1.msra.mxu0 0.0
    %117 = vmatprep.mubr.f32.mxu0 0.0
    %118 = vmatmul.mubr.f32.gmra.mrb[0].mxu0 %v51
    %v119 = vpop.f32.mrb[0].mxu0
    %v120 = vadd.f32 %v47, %v119
    %v121 = vpop.f32.mrb[0].mxu0
    %122 = vdwg.mxu0
    %v123 = vtanh.pop %v120
    %v124 = vmul.f32 %v123, 2.0
    %v125 = vld [vmem:[%s5] sm:$0xff]
    %v126 = vld [vmem:[%s5 + $0x8] sm:$0xff]
    %v127 = vld [vmem:[%s5 + $0x10] sm:$0xff]
    %v128 = vld [vmem:[%s5 + $0x18] sm:$0xff]
    %v129 = vld [vmem:[%s6] sm:$0x1]
    %v131 = vlaneseq
    %v132 = vshrl.u32 %v131, 7
    %v133 = vsub.s32 0, %v132
    %v134 = vrot.slane %v129, %v133
    %v137 = vsel %vm49, %v36, 0
    %v140 = vsel %vm49, %v37, 0
    %142 = vmatprep.subr.mxu0 0.0
    %143 = vmatpush1.msra.mxu0 %v125
    %144 = vmatprep.subr.mxu0 0.0
    %145 = vmatpush1.msra.mxu0 %v126
    %146 = vmatprep.subr.mxu0 0.0
    %147 = vmatpush1.msra.mxu0 %v127
    %148 = vmatprep.subr.mxu0 0.0
    %149 = vmatpush1.msra.mxu0 %v128
    %150 = vmatprep.subr.mxu0 0.0
    %151 = vmatpush1.msra.mxu0 0.0
    %152 = vmatprep.subr.mxu0 0.0
    %153 = vmatpush1.msra.mxu0 0.0
    %154 = vmatprep.subr.mxu0 0.0
    %155 = vmatpush1.msra.mxu0 0.0
    %156 = vmatprep.subr.mxu0 0.0
    %157 = vmatpush1.msra.mxu0 0.0
    %158 = vmatprep.subr.mxu0 0.0
    %159 = vmatpush1.msra.mxu0 0.0
    %160 = vmatprep.subr.mxu0 0.0
    %161 = vmatpush1.msra.mxu0 0.0
    %162 = vmatprep.subr.mxu0 0.0
    %163 = vmatpush1.msra.mxu0 0.0
    %164 = vmatprep.subr.mxu0 0.0
    %165 = vmatpush1.msra.mxu0 0.0
    %166 = vmatprep.subr.mxu0 0.0
    %167 = vmatpush1.msra.mxu0 0.0
    %168 = vmatprep.subr.mxu0 0.0
    %169 = vmatpush1.msra.mxu0 0.0
    %170 = vmatprep.subr.mxu0 0.0
    %171 = vmatpush1.msra.mxu0 0.0
    %172 = vmatprep.subr.mxu0 0.0
    %173 = vmatpush1.msra.mxu0 0.0
    %174 = vmatprep.subr.mxu0 0.0
    %175 = vmatpush1.msra.mxu0 0.0
    %176 = vmatprep.subr.mxu0 0.0
    %177 = vmatpush1.msra.mxu0 0.0
    %178 = vmatprep.subr.mxu0 0.0
    %179 = vmatpush1.msra.mxu0 0.0
    %180 = vmatprep.subr.mxu0 0.0
    %181 = vmatpush1.msra.mxu0 0.0
    %182 = vmatprep.subr.mxu0 0.0
    %183 = vmatpush1.msra.mxu0 0.0
    %184 = vmatprep.subr.mxu0 0.0
    %185 = vmatpush1.msra.mxu0 0.0
    %186 = vmatprep.subr.mxu0 0.0
    %187 = vmatpush1.msra.mxu0 0.0
    %188 = vmatprep.subr.mxu0 0.0
    %189 = vmatpush1.msra.mxu0 0.0
    %190 = vmatprep.subr.mxu0 0.0
    %191 = vmatpush1.msra.mxu0 0.0
    %192 = vmatprep.subr.mxu0 0.0
    %193 = vmatpush1.msra.mxu0 0.0
    %194 = vmatprep.subr.mxu0 0.0
    %195 = vmatpush1.msra.mxu0 0.0
    %196 = vmatprep.subr.mxu0 0.0
    %197 = vmatpush1.msra.mxu0 0.0
    %198 = vmatprep.subr.mxu0 0.0
    %199 = vmatpush1.msra.mxu0 0.0
    %200 = vmatprep.subr.mxu0 0.0
    %201 = vmatpush1.msra.mxu0 0.0
    %202 = vmatprep.subr.mxu0 0.0
    %203 = vmatpush1.msra.mxu0 0.0
    %204 = vmatprep.subr.mxu0 0.0
    %205 = vmatpush1.msra.mxu0 0.0
    %206 = vmatprep.mubr.f32.mxu0 0.0
    %207 = vmatmul.mubr.f32.gmra.mrb[0].mxu0 %v137
    %v208 = vpop.f32.mrb[0].mxu0
    %v209 = vadd.f32 %v134, %v208
    %v210 = vpop.f32.mrb[0].mxu0
    %211 = vmatprep.mubr.f32.mxu0 0.0
    %212 = vmatmul.mubr.f32.gmra.mrb[0].mxu0 %v140
    %v213 = vpop.f32.mrb[0].mxu0
    %v214 = vadd.f32 %v134, %v213
    %v215 = vpop.f32.mrb[0].mxu0
    %216 = vdwg.mxu0
    %v217 = vtanh.pop %v209
    %v218 = vtanh.pop %v214
    %v221 = vunpack.c.l.s4 1966171168
    %v222 = vunpack.c.0.s8 %v221
    %v223 = vlaneseq
    %v224 = vshrl.u32 %v223, 7
    %v225 = vsub.s32 %v222, %v224
    %v226 = vrot.slane %v124, %v225
    %v227 = vcombine.high %v226, %v226
    %v229 = vunpack.c.l.s4 1966171168
    %v230 = vunpack.c.0.s8 %v229
    %v231 = vlaneseq
    %v232 = vshrl.u32 %v231, 7
    %v233 = vsub.s32 %v230, %v232
    %v234 = vrot.slane %v226, %v233
    %v236 = vunpack.c.l.s4 1966171168
    %v237 = vunpack.c.0.s8 %v236
    %v238 = vlaneseq
    %v239 = vshrl.u32 %v238, 7
    %v240 = vsub.s32 %v237, %v239
    %v241 = vrot.slane %v227, %v240
    %v242 = vlaneseq
    %v243 = vshrl.u32 %v242, 7
    %v244 = vsub.s32 0, %v243
    %v245 = vrot.slane %v234, %v244
    %v246 = vlaneseq
    %v247 = vshrl.u32 %v246, 7
    %v248 = vsub.s32 0, %v247
    %v249 = vrot.slane %v241, %v248
    %v252 = vmul.f32 %v245, %v217
    %v253 = vmul.f32 %v249, %v218
    %v254 = vlaneseq
    %v255 = vand.u32 %v254, 127
    %v256 = vld [vmem:[%s2] sm:$0x3]
    %257 = vset.pattern.permute.xlu0 0
    %258 = vperm.xlu0 %257, %v256
    %v259 = vpop.permute.xlu0 %258
    %vm260 = vcmp.lt.s32.totalorder %v255, %v259
    %v261 = vsel %vm49, %v252, 0.0
    %262 = vadd.xlane.f32.xlu0 %v261
    %v263 = vpop.xlane.xlu0 %262
    %v264 = vsel %vm49, %v253, 0.0
    %265 = vadd.xlane.f32.xlu0 %v264
    %v266 = vpop.xlane.xlu0 %265
    %v269 = vlaneseq
    %v270 = vshrl.u32 %v269, 7
    %v271 = vsub.s32 %v255, %v270
    %v272 = vrot.slane %v263, %v271
    %v273 = vlaneseq
    %v274 = vshrl.u32 %v273, 7
    %v275 = vsub.s32 %v255, %v274
    %v276 = vrot.slane %v266, %v275
    %vm277 = vcmask 1041409
    %v278 = vsel %vm277, %v276, %v272
    %v280 = vsel %vm260, %v278, -1e+30
    %vm281 = vcmask 58368
    %v282 = vsel %vm281, %v280, -inf
    %283 = vmax.xlane.f32.xlu0 %v282
    %v284 = vpop.xlane.xlu0 %283
    %v285 = vsub.f32 %v280, %v284
    %v286 = vmul.f32 %v285, 1.442695
    %v287 = vpow.pop %v286
    %v288 = vsel %vm281, %v287, 0.0
    %289 = vadd.xlane.f32.xlu0 %v288
    %v290 = vpop.xlane.xlu0 %289
    %v291 = vrcp.pop %v290
    %v292 = vmul.f32 %v287, %v291
    %293 = vst.msk [vmem:[%s9] sm:$0x3] %vm281, %v292
    %v296 = vunpack.c.l.s4 1966171168
    %v297 = vunpack.c.0.s8 %v296
    %v298 = vlaneseq
    %v299 = vshrl.u32 %v298, 7
    %v300 = vsub.s32 %v297, %v299
    %v301 = vrot.slane %v292, %v300
    %v302 = vcombine.high %v301, %v301
    %v304 = vunpack.c.l.s4 1966171168
    %v305 = vunpack.c.0.s8 %v304
    %v306 = vlaneseq
    %v307 = vshrl.u32 %v306, 7
    %v308 = vsub.s32 %v305, %v307
    %v309 = vrot.slane %v301, %v308
    %v311 = vunpack.c.l.s4 1966171168
    %v312 = vunpack.c.0.s8 %v311
    %v313 = vlaneseq
    %v314 = vshrl.u32 %v313, 7
    %v315 = vsub.s32 %v312, %v314
    %v316 = vrot.slane %v302, %v315
    %318 = vrot.lane.b32.xlu0 %v217, 64
    %v319 = vpop.permute.xlu0 %318
    %vm321 = vcmask 64512
    %v322 = vsel %vm321, %v309, 0
    %324 = vmatprep.subr.mxu0 0.0
    %325 = vmatpush1.msra.mxu0 %v319
    %326 = vmatprep.subr.mxu0 0.0
    %327 = vmatpush1.msra.mxu0 0.0
    %328 = vmatprep.subr.mxu0 0.0
    %329 = vmatpush1.msra.mxu0 0.0
    %330 = vmatprep.subr.mxu0 0.0
    %331 = vmatpush1.msra.mxu0 0.0
    %332 = vmatprep.subr.mxu0 0.0
    %333 = vmatpush1.msra.mxu0 0.0
    %334 = vmatprep.subr.mxu0 0.0
    %335 = vmatpush1.msra.mxu0 0.0
    %336 = vmatprep.subr.mxu0 0.0
    %337 = vmatpush1.msra.mxu0 0.0
    %338 = vmatprep.subr.mxu0 0.0
    %339 = vmatpush1.msra.mxu0 0.0
    %340 = vmatprep.subr.mxu0 0.0
    %341 = vmatpush1.msra.mxu0 0.0
    %342 = vmatprep.subr.mxu0 0.0
    %343 = vmatpush1.msra.mxu0 0.0
    %344 = vmatprep.subr.mxu0 0.0
    %345 = vmatpush1.msra.mxu0 0.0
    %346 = vmatprep.subr.mxu0 0.0
    %347 = vmatpush1.msra.mxu0 0.0
    %348 = vmatprep.subr.mxu0 0.0
    %349 = vmatpush1.msra.mxu0 0.0
    %350 = vmatprep.subr.mxu0 0.0
    %351 = vmatpush1.msra.mxu0 0.0
    %352 = vmatprep.subr.mxu0 0.0
    %353 = vmatpush1.msra.mxu0 0.0
    %354 = vmatprep.subr.mxu0 0.0
    %355 = vmatpush1.msra.mxu0 0.0
    %356 = vmatprep.subr.mxu0 0.0
    %357 = vmatpush1.msra.mxu0 0.0
    %358 = vmatprep.subr.mxu0 0.0
    %359 = vmatpush1.msra.mxu0 0.0
    %360 = vmatprep.subr.mxu0 0.0
    %361 = vmatpush1.msra.mxu0 0.0
    %362 = vmatprep.subr.mxu0 0.0
    %363 = vmatpush1.msra.mxu0 0.0
    %364 = vmatprep.subr.mxu0 0.0
    %365 = vmatpush1.msra.mxu0 0.0
    %366 = vmatprep.subr.mxu0 0.0
    %367 = vmatpush1.msra.mxu0 0.0
    %368 = vmatprep.subr.mxu0 0.0
    %369 = vmatpush1.msra.mxu0 0.0
    %370 = vmatprep.subr.mxu0 0.0
    %371 = vmatpush1.msra.mxu0 0.0
    %372 = vmatprep.subr.mxu0 0.0
    %373 = vmatpush1.msra.mxu0 0.0
    %374 = vmatprep.subr.mxu0 0.0
    %375 = vmatpush1.msra.mxu0 0.0
    %376 = vmatprep.subr.mxu0 0.0
    %377 = vmatpush1.msra.mxu0 0.0
    %378 = vmatprep.subr.mxu0 0.0
    %379 = vmatpush1.msra.mxu0 0.0
    %380 = vmatprep.subr.mxu0 0.0
    %381 = vmatpush1.msra.mxu0 0.0
    %382 = vmatprep.subr.mxu0 0.0
    %383 = vmatpush1.msra.mxu0 0.0
    %384 = vmatprep.subr.mxu0 0.0
    %385 = vmatpush1.msra.mxu0 0.0
    %386 = vmatprep.subr.mxu0 0.0
    %387 = vmatpush1.msra.mxu0 0.0
    %388 = vmatprep.mubr.f32.mxu0 0.0
    %389 = vmatmul.mubr.f32.gmra.mrb[0].mxu0 %v322
    %v390 = vpop.f32.mrb[0].mxu0
    %v391 = vadd.f32 0.0, %v390
    %v392 = vpop.f32.mrb[0].mxu0
    %393 = vdwg.mxu0
    %395 = vrot.lane.b32.xlu0 %v218, 64
    %v396 = vpop.permute.xlu0 %395
    %v398 = vsel %vm321, %v316, 0
    %400 = vmatprep.subr.mxu0 0.0
    %401 = vmatpush1.msra.mxu0 %v396
    %402 = vmatprep.subr.mxu0 0.0
    %403 = vmatpush1.msra.mxu0 0.0
    %404 = vmatprep.subr.mxu0 0.0
    %405 = vmatpush1.msra.mxu0 0.0
    %406 = vmatprep.subr.mxu0 0.0
    %407 = vmatpush1.msra.mxu0 0.0
    %408 = vmatprep.subr.mxu0 0.0
    %409 = vmatpush1.msra.mxu0 0.0
    %410 = vmatprep.subr.mxu0 0.0
    %411 = vmatpush1.msra.mxu0 0.0
    %412 = vmatprep.subr.mxu0 0.0
    %413 = vmatpush1.msra.mxu0 0.0
    %414 = vmatprep.subr.mxu0 0.0
    %415 = vmatpush1.msra.mxu0 0.0
    %416 = vmatprep.subr.mxu0 0.0
    %417 = vmatpush1.msra.mxu0 0.0
    %418 = vmatprep.subr.mxu0 0.0
    %419 = vmatpush1.msra.mxu0 0.0
    %420 = vmatprep.subr.mxu0 0.0
    %421 = vmatpush1.msra.mxu0 0.0
    %422 = vmatprep.subr.mxu0 0.0
    %423 = vmatpush1.msra.mxu0 0.0
    %424 = vmatprep.subr.mxu0 0.0
    %425 = vmatpush1.msra.mxu0 0.0
    %426 = vmatprep.subr.mxu0 0.0
    %427 = vmatpush1.msra.mxu0 0.0
    %428 = vmatprep.subr.mxu0 0.0
    %429 = vmatpush1.msra.mxu0 0.0
    %430 = vmatprep.subr.mxu0 0.0
    %431 = vmatpush1.msra.mxu0 0.0
    %432 = vmatprep.subr.mxu0 0.0
    %433 = vmatpush1.msra.mxu0 0.0
    %434 = vmatprep.subr.mxu0 0.0
    %435 = vmatpush1.msra.mxu0 0.0
    %436 = vmatprep.subr.mxu0 0.0
    %437 = vmatpush1.msra.mxu0 0.0
    %438 = vmatprep.subr.mxu0 0.0
    %439 = vmatpush1.msra.mxu0 0.0
    %440 = vmatprep.subr.mxu0 0.0
    %441 = vmatpush1.msra.mxu0 0.0
    %442 = vmatprep.subr.mxu0 0.0
    %443 = vmatpush1.msra.mxu0 0.0
    %444 = vmatprep.subr.mxu0 0.0
    %445 = vmatpush1.msra.mxu0 0.0
    %446 = vmatprep.subr.mxu0 0.0
    %447 = vmatpush1.msra.mxu0 0.0
    %448 = vmatprep.subr.mxu0 0.0
    %449 = vmatpush1.msra.mxu0 0.0
    %450 = vmatprep.subr.mxu0 0.0
    %451 = vmatpush1.msra.mxu0 0.0
    %452 = vmatprep.subr.mxu0 0.0
    %453 = vmatpush1.msra.mxu0 0.0
    %454 = vmatprep.subr.mxu0 0.0
    %455 = vmatpush1.msra.mxu0 0.0
    %456 = vmatprep.subr.mxu0 0.0
    %457 = vmatpush1.msra.mxu0 0.0
    %458 = vmatprep.subr.mxu0 0.0
    %459 = vmatpush1.msra.mxu0 0.0
    %460 = vmatprep.subr.mxu0 0.0
    %461 = vmatpush1.msra.mxu0 0.0
    %462 = vmatprep.subr.mxu0 0.0
    %463 = vmatpush1.msra.mxu0 0.0
    %464 = vmatprep.mubr.f32.mxu0 0.0
    %465 = vmatmul.mubr.f32.gmra.mrb[0].mxu0 %v398
    %v466 = vpop.f32.mrb[0].mxu0
    %v467 = vadd.f32 0.0, %v466
    %v468 = vpop.f32.mrb[0].mxu0
    %469 = vdwg.mxu0
    %v470 = vld [vmem:[%s7] sm:$0xff]
    %v471 = vld [vmem:[%s7 + $0x8] sm:$0xff]
    %v472 = vld [vmem:[%s7 + $0x10] sm:$0xff]
    %v473 = vld [vmem:[%s7 + $0x18] sm:$0xff]
    %476 = vrot.lane.b32.xlu0 %v252, 96
    %v477 = vpop.permute.xlu0 %476
    %478 = vrot.lane.b32.xlu0 %v253, 96
    %v479 = vpop.permute.xlu0 %478
    %v482 = vsel %vm49, %v477, 0.0
    %483 = vadd.xlane.f32.xlu0 %v482
    %v484 = vpop.xlane.xlu0 %483
    %v485 = vsel %vm49, %v479, 0.0
    %486 = vadd.xlane.f32.xlu0 %v485
    %v487 = vpop.xlane.xlu0 %486
    %v490 = vlaneseq
    %v491 = vshrl.u32 %v490, 7
    %v492 = vsub.s32 %v255, %v491
    %v493 = vrot.slane %v484, %v492
    %v494 = vlaneseq
    %v495 = vshrl.u32 %v494, 7
    %v496 = vsub.s32 %v255, %v495
    %v497 = vrot.slane %v487, %v496
    %v498 = vsel %vm277, %v497, %v493
    %v500 = vsel %vm260, %v498, -1e+30
    %v501 = vsel %vm281, %v500, -inf
    %502 = vmax.xlane.f32.xlu0 %v501
    %v503 = vpop.xlane.xlu0 %502
    %v504 = vsub.f32 %v500, %v503
    %v505 = vmul.f32 %v504, 1.442695
    %v506 = vpow.pop %v505
    %v507 = vsel %vm281, %v506, 0.0
    %508 = vadd.xlane.f32.xlu0 %v507
    %v509 = vpop.xlane.xlu0 %508
    %v510 = vrcp.pop %v509
    %v511 = vmul.f32 %v506, %v510
    %s512 = scalar_lea.vmem %s9, 2
    %513 = vst.msk [vmem:[%s512] sm:$0x3] %vm281, %v511
    %v516 = vunpack.c.l.s4 1966171168
    %v517 = vunpack.c.0.s8 %v516
    %v518 = vlaneseq
    %v519 = vshrl.u32 %v518, 7
    %v520 = vsub.s32 %v517, %v519
    %v521 = vrot.slane %v511, %v520
    %v522 = vcombine.high %v521, %v521
    %v524 = vunpack.c.l.s4 1966171168
    %v525 = vunpack.c.0.s8 %v524
    %v526 = vlaneseq
    %v527 = vshrl.u32 %v526, 7
    %v528 = vsub.s32 %v525, %v527
    %v529 = vrot.slane %v521, %v528
    %v531 = vunpack.c.l.s4 1966171168
    %v532 = vunpack.c.0.s8 %v531
    %v533 = vlaneseq
    %v534 = vshrl.u32 %v533, 7
    %v535 = vsub.s32 %v532, %v534
    %v536 = vrot.slane %v522, %v535
    %537 = vrot.lane.b32.xlu0 %v217, 32
    %v538 = vpop.permute.xlu0 %537
    %v540 = vsel %vm321, %v529, 0
    %542 = vmatprep.subr.mxu0 0.0
    %543 = vmatpush1.msra.mxu0 %v538
    %544 = vmatprep.subr.mxu0 0.0
    %545 = vmatpush1.msra.mxu0 0.0
    %546 = vmatprep.subr.mxu0 0.0
    %547 = vmatpush1.msra.mxu0 0.0
    %548 = vmatprep.subr.mxu0 0.0
    %549 = vmatpush1.msra.mxu0 0.0
    %550 = vmatprep.subr.mxu0 0.0
    %551 = vmatpush1.msra.mxu0 0.0
    %552 = vmatprep.subr.mxu0 0.0
    %553 = vmatpush1.msra.mxu0 0.0
    %554 = vmatprep.subr.mxu0 0.0
    %555 = vmatpush1.msra.mxu0 0.0
    %556 = vmatprep.subr.mxu0 0.0
    %557 = vmatpush1.msra.mxu0 0.0
    %558 = vmatprep.subr.mxu0 0.0
    %559 = vmatpush1.msra.mxu0 0.0
    %560 = vmatprep.subr.mxu0 0.0
    %561 = vmatpush1.msra.mxu0 0.0
    %562 = vmatprep.subr.mxu0 0.0
    %563 = vmatpush1.msra.mxu0 0.0
    %564 = vmatprep.subr.mxu0 0.0
    %565 = vmatpush1.msra.mxu0 0.0
    %566 = vmatprep.subr.mxu0 0.0
    %567 = vmatpush1.msra.mxu0 0.0
    %568 = vmatprep.subr.mxu0 0.0
    %569 = vmatpush1.msra.mxu0 0.0
    %570 = vmatprep.subr.mxu0 0.0
    %571 = vmatpush1.msra.mxu0 0.0
    %572 = vmatprep.subr.mxu0 0.0
    %573 = vmatpush1.msra.mxu0 0.0
    %574 = vmatprep.subr.mxu0 0.0
    %575 = vmatpush1.msra.mxu0 0.0
    %576 = vmatprep.subr.mxu0 0.0
    %577 = vmatpush1.msra.mxu0 0.0
    %578 = vmatprep.subr.mxu0 0.0
    %579 = vmatpush1.msra.mxu0 0.0
    %580 = vmatprep.subr.mxu0 0.0
    %581 = vmatpush1.msra.mxu0 0.0
    %582 = vmatprep.subr.mxu0 0.0
    %583 = vmatpush1.msra.mxu0 0.0
    %584 = vmatprep.subr.mxu0 0.0
    %585 = vmatpush1.msra.mxu0 0.0
    %586 = vmatprep.subr.mxu0 0.0
    %587 = vmatpush1.msra.mxu0 0.0
    %588 = vmatprep.subr.mxu0 0.0
    %589 = vmatpush1.msra.mxu0 0.0
    %590 = vmatprep.subr.mxu0 0.0
    %591 = vmatpush1.msra.mxu0 0.0
    %592 = vmatprep.subr.mxu0 0.0
    %593 = vmatpush1.msra.mxu0 0.0
    %594 = vmatprep.subr.mxu0 0.0
    %595 = vmatpush1.msra.mxu0 0.0
    %596 = vmatprep.subr.mxu0 0.0
    %597 = vmatpush1.msra.mxu0 0.0
    %598 = vmatprep.subr.mxu0 0.0
    %599 = vmatpush1.msra.mxu0 0.0
    %600 = vmatprep.subr.mxu0 0.0
    %601 = vmatpush1.msra.mxu0 0.0
    %602 = vmatprep.subr.mxu0 0.0
    %603 = vmatpush1.msra.mxu0 0.0
    %604 = vmatprep.subr.mxu0 0.0
    %605 = vmatpush1.msra.mxu0 0.0
    %606 = vmatprep.mubr.f32.mxu0 0.0
    %607 = vmatmul.mubr.f32.gmra.mrb[0].mxu0 %v540
    %v608 = vpop.f32.mrb[0].mxu0
    %v609 = vadd.f32 0.0, %v608
    %v610 = vpop.f32.mrb[0].mxu0
    %611 = vdwg.mxu0
    %612 = vrot.lane.b32.xlu0 %v218, 32
    %v613 = vpop.permute.xlu0 %612
    %v615 = vsel %vm321, %v536, 0
    %617 = vmatprep.subr.mxu0 0.0
    %618 = vmatpush1.msra.mxu0 %v613
    %619 = vmatprep.subr.mxu0 0.0
    %620 = vmatpush1.msra.mxu0 0.0
    %621 = vmatprep.subr.mxu0 0.0
    %622 = vmatpush1.msra.mxu0 0.0
    %623 = vmatprep.subr.mxu0 0.0
    %624 = vmatpush1.msra.mxu0 0.0
    %625 = vmatprep.subr.mxu0 0.0
    %626 = vmatpush1.msra.mxu0 0.0
    %627 = vmatprep.subr.mxu0 0.0
    %628 = vmatpush1.msra.mxu0 0.0
    %629 = vmatprep.subr.mxu0 0.0
    %630 = vmatpush1.msra.mxu0 0.0
    %631 = vmatprep.subr.mxu0 0.0
    %632 = vmatpush1.msra.mxu0 0.0
    %633 = vmatprep.subr.mxu0 0.0
    %634 = vmatpush1.msra.mxu0 0.0
    %635 = vmatprep.subr.mxu0 0.0
    %636 = vmatpush1.msra.mxu0 0.0
    %637 = vmatprep.subr.mxu0 0.0
    %638 = vmatpush1.msra.mxu0 0.0
    %639 = vmatprep.subr.mxu0 0.0
    %640 = vmatpush1.msra.mxu0 0.0
    %641 = vmatprep.subr.mxu0 0.0
    %642 = vmatpush1.msra.mxu0 0.0
    %643 = vmatprep.subr.mxu0 0.0
    %644 = vmatpush1.msra.mxu0 0.0
    %645 = vmatprep.subr.mxu0 0.0
    %646 = vmatpush1.msra.mxu0 0.0
    %647 = vmatprep.subr.mxu0 0.0
    %648 = vmatpush1.msra.mxu0 0.0
    %649 = vmatprep.subr.mxu0 0.0
    %650 = vmatpush1.msra.mxu0 0.0
    %651 = vmatprep.subr.mxu0 0.0
    %652 = vmatpush1.msra.mxu0 0.0
    %653 = vmatprep.subr.mxu0 0.0
    %654 = vmatpush1.msra.mxu0 0.0
    %655 = vmatprep.subr.mxu0 0.0
    %656 = vmatpush1.msra.mxu0 0.0
    %657 = vmatprep.subr.mxu0 0.0
    %658 = vmatpush1.msra.mxu0 0.0
    %659 = vmatprep.subr.mxu0 0.0
    %660 = vmatpush1.msra.mxu0 0.0
    %661 = vmatprep.subr.mxu0 0.0
    %662 = vmatpush1.msra.mxu0 0.0
    %663 = vmatprep.subr.mxu0 0.0
    %664 = vmatpush1.msra.mxu0 0.0
    %665 = vmatprep.subr.mxu0 0.0
    %666 = vmatpush1.msra.mxu0 0.0
    %667 = vmatprep.subr.mxu0 0.0
    %668 = vmatpush1.msra.mxu0 0.0
    %669 = vmatprep.subr.mxu0 0.0
    %670 = vmatpush1.msra.mxu0 0.0
    %671 = vmatprep.subr.mxu0 0.0
    %672 = vmatpush1.msra.mxu0 0.0
    %673 = vmatprep.subr.mxu0 0.0
    %674 = vmatpush1.msra.mxu0 0.0
    %675 = vmatprep.subr.mxu0 0.0
    %676 = vmatpush1.msra.mxu0 0.0
    %677 = vmatprep.subr.mxu0 0.0
    %678 = vmatpush1.msra.mxu0 0.0
    %679 = vmatprep.subr.mxu0 0.0
    %680 = vmatpush1.msra.mxu0 0.0
    %681 = vmatprep.mubr.f32.mxu0 0.0
    %682 = vmatmul.mubr.f32.gmra.mrb[0].mxu0 %v615
    %v683 = vpop.f32.mrb[0].mxu0
    %v684 = vadd.f32 0.0, %v683
    %v685 = vpop.f32.mrb[0].mxu0
    %686 = vdwg.mxu0
    %s687 = scalar_lea.vmem %s7, 32
    %v688 = vld [vmem:[%s687] sm:$0xff]
    %v689 = vld [vmem:[%s687 + $0x8] sm:$0xff]
    %v690 = vld [vmem:[%s687 + $0x10] sm:$0xff]
    %v691 = vld [vmem:[%s687 + $0x18] sm:$0xff]
    %v694 = vrot.slane %v684, 7
    %v695 = vsel %vm277, %v694, %v609
    %v696 = vsel %vm49, %v695, 0
    %698 = vmatprep.subr.mxu0 0.0
    %699 = vmatpush1.msra.mxu0 %v688
    %700 = vmatprep.subr.mxu0 0.0
    %701 = vmatpush1.msra.mxu0 %v689
    %702 = vmatprep.subr.mxu0 0.0
    %703 = vmatpush1.msra.mxu0 %v690
    %704 = vmatprep.subr.mxu0 0.0
    %705 = vmatpush1.msra.mxu0 %v691
    %706 = vmatprep.subr.mxu0 0.0
    %707 = vmatpush1.msra.mxu0 0.0
    %708 = vmatprep.subr.mxu0 0.0
    %709 = vmatpush1.msra.mxu0 0.0
    %710 = vmatprep.subr.mxu0 0.0
    %711 = vmatpush1.msra.mxu0 0.0
    %712 = vmatprep.subr.mxu0 0.0
    %713 = vmatpush1.msra.mxu0 0.0
    %714 = vmatprep.subr.mxu0 0.0
    %715 = vmatpush1.msra.mxu0 0.0
    %716 = vmatprep.subr.mxu0 0.0
    %717 = vmatpush1.msra.mxu0 0.0
    %718 = vmatprep.subr.mxu0 0.0
    %719 = vmatpush1.msra.mxu0 0.0
    %720 = vmatprep.subr.mxu0 0.0
    %721 = vmatpush1.msra.mxu0 0.0
    %722 = vmatprep.subr.mxu0 0.0
    %723 = vmatpush1.msra.mxu0 0.0
    %724 = vmatprep.subr.mxu0 0.0
    %725 = vmatpush1.msra.mxu0 0.0
    %726 = vmatprep.subr.mxu0 0.0
    %727 = vmatpush1.msra.mxu0 0.0
    %728 = vmatprep.subr.mxu0 0.0
    %729 = vmatpush1.msra.mxu0 0.0
    %730 = vmatprep.subr.mxu0 0.0
    %731 = vmatpush1.msra.mxu0 0.0
    %732 = vmatprep.subr.mxu0 0.0
    %733 = vmatpush1.msra.mxu0 0.0
    %734 = vmatprep.subr.mxu0 0.0
    %735 = vmatpush1.msra.mxu0 0.0
    %736 = vmatprep.subr.mxu0 0.0
    %737 = vmatpush1.msra.mxu0 0.0
    %738 = vmatprep.subr.mxu0 0.0
    %739 = vmatpush1.msra.mxu0 0.0
    %740 = vmatprep.subr.mxu0 0.0
    %741 = vmatpush1.msra.mxu0 0.0
    %742 = vmatprep.subr.mxu0 0.0
    %743 = vmatpush1.msra.mxu0 0.0
    %744 = vmatprep.subr.mxu0 0.0
    %745 = vmatpush1.msra.mxu0 0.0
    %746 = vmatprep.subr.mxu0 0.0
    %747 = vmatpush1.msra.mxu0 0.0
    %748 = vmatprep.subr.mxu0 0.0
    %749 = vmatpush1.msra.mxu0 0.0
    %750 = vmatprep.subr.mxu0 0.0
    %751 = vmatpush1.msra.mxu0 0.0
    %752 = vmatprep.subr.mxu0 0.0
    %753 = vmatpush1.msra.mxu0 0.0
    %754 = vmatprep.subr.mxu0 0.0
    %755 = vmatpush1.msra.mxu0 0.0
    %756 = vmatprep.subr.mxu0 0.0
    %757 = vmatpush1.msra.mxu0 0.0
    %758 = vmatprep.subr.mxu0 0.0
    %759 = vmatpush1.msra.mxu0 0.0
    %760 = vmatprep.subr.mxu0 0.0
    %761 = vmatpush1.msra.mxu0 0.0
    %762 = vmatprep.mubr.f32.mxu0 0.0
    %763 = vmatmul.mubr.f32.gmra.mrb[0].mxu0 %v696
    %v764 = vpop.f32.mrb[0].mxu0
    %v765 = vadd.f32 0.0, %v764
    %v766 = vpop.f32.mrb[0].mxu0
    %767 = vdwg.mxu0
    %v770 = vrot.slane %v467, 7
    %v771 = vsel %vm277, %v770, %v391
    %v772 = vsel %vm49, %v771, 0
    %774 = vmatprep.subr.mxu0 0.0
    %775 = vmatpush1.msra.mxu0 %v470
    %776 = vmatprep.subr.mxu0 0.0
    %777 = vmatpush1.msra.mxu0 %v471
    %778 = vmatprep.subr.mxu0 0.0
    %779 = vmatpush1.msra.mxu0 %v472
    %780 = vmatprep.subr.mxu0 0.0
    %781 = vmatpush1.msra.mxu0 %v473
    %782 = vmatprep.subr.mxu0 0.0
    %783 = vmatpush1.msra.mxu0 0.0
    %784 = vmatprep.subr.mxu0 0.0
    %785 = vmatpush1.msra.mxu0 0.0
    %786 = vmatprep.subr.mxu0 0.0
    %787 = vmatpush1.msra.mxu0 0.0
    %788 = vmatprep.subr.mxu0 0.0
    %789 = vmatpush1.msra.mxu0 0.0
    %790 = vmatprep.subr.mxu0 0.0
    %791 = vmatpush1.msra.mxu0 0.0
    %792 = vmatprep.subr.mxu0 0.0
    %793 = vmatpush1.msra.mxu0 0.0
    %794 = vmatprep.subr.mxu0 0.0
    %795 = vmatpush1.msra.mxu0 0.0
    %796 = vmatprep.subr.mxu0 0.0
    %797 = vmatpush1.msra.mxu0 0.0
    %798 = vmatprep.subr.mxu0 0.0
    %799 = vmatpush1.msra.mxu0 0.0
    %800 = vmatprep.subr.mxu0 0.0
    %801 = vmatpush1.msra.mxu0 0.0
    %802 = vmatprep.subr.mxu0 0.0
    %803 = vmatpush1.msra.mxu0 0.0
    %804 = vmatprep.subr.mxu0 0.0
    %805 = vmatpush1.msra.mxu0 0.0
    %806 = vmatprep.subr.mxu0 0.0
    %807 = vmatpush1.msra.mxu0 0.0
    %808 = vmatprep.subr.mxu0 0.0
    %809 = vmatpush1.msra.mxu0 0.0
    %810 = vmatprep.subr.mxu0 0.0
    %811 = vmatpush1.msra.mxu0 0.0
    %812 = vmatprep.subr.mxu0 0.0
    %813 = vmatpush1.msra.mxu0 0.0
    %814 = vmatprep.subr.mxu0 0.0
    %815 = vmatpush1.msra.mxu0 0.0
    %816 = vmatprep.subr.mxu0 0.0
    %817 = vmatpush1.msra.mxu0 0.0
    %818 = vmatprep.subr.mxu0 0.0
    %819 = vmatpush1.msra.mxu0 0.0
    %820 = vmatprep.subr.mxu0 0.0
    %821 = vmatpush1.msra.mxu0 0.0
    %822 = vmatprep.subr.mxu0 0.0
    %823 = vmatpush1.msra.mxu0 0.0
    %824 = vmatprep.subr.mxu0 0.0
    %825 = vmatpush1.msra.mxu0 0.0
    %826 = vmatprep.subr.mxu0 0.0
    %827 = vmatpush1.msra.mxu0 0.0
    %828 = vmatprep.subr.mxu0 0.0
    %829 = vmatpush1.msra.mxu0 0.0
    %830 = vmatprep.subr.mxu0 0.0
    %831 = vmatpush1.msra.mxu0 0.0
    %832 = vmatprep.subr.mxu0 0.0
    %833 = vmatpush1.msra.mxu0 0.0
    %834 = vmatprep.subr.mxu0 0.0
    %835 = vmatpush1.msra.mxu0 0.0
    %836 = vmatprep.subr.mxu0 0.0
    %837 = vmatpush1.msra.mxu0 0.0
    %838 = vmatprep.mubr.f32.mxu0 0.0
    %839 = vmatmul.mubr.f32.gmra.mrb[0].mxu0 %v772
    %v840 = vpop.f32.mrb[0].mxu0
    %v841 = vadd.f32 %v765, %v840
    %v842 = vpop.f32.mrb[0].mxu0
    %843 = vdwg.mxu0
    %v844 = vld [vmem:[%s8] sm:$0x1]
    %v846 = vlaneseq
    %v847 = vshrl.u32 %v846, 7
    %v848 = vsub.s32 0, %v847
    %v849 = vrot.slane %v844, %v848
    %v851 = vadd.f32 %v841, %v849
    %vm852 = vcmask 254976
    %853 = vst.msk [vmem:[#allocation2] sm:$0x3] %vm852, %v851
    // Predicated region
    $region38: #{attention_forward.1} parent=1 // pred_check
      _
    $region39: #{attention_forward.1} parent=1 // pred_check_branch
      %855 = sbr.rel (0) target = $region41
    $region40: #{attention_forward.1} parent=1 // pred_region
      _
    $region41: #{attention_forward.1} parent=1 // pred_fallthru
      _
    // Predicated region
    $region42: #{attention_forward.1} parent=1 // pred_check
      _
    $region43: #{attention_forward.1} parent=1 // pred_check_branch
      %857 = sbr.rel (0) target = $region45
    $region44: #{attention_forward.1} parent=1 // pred_region
      %s859 = ssub.s32 32, 32
      %860 = vsyncadd [#allocation3], %s859
      %s862 = sshll.u32 [#allocation2], 4
      %s863 = int_to_ptr.vmem [resolvable:$true] %s862
      %865 = dma.vmem_to_hbm [thread:$0]  %s863, 32, %s10, [#allocation3]
    $region45: #{attention_forward.1} parent=1 // pred_fallthru
      _
    // Predicated region
    $region46: #{attention_forward.1} parent=1 // pred_check
      _
    $region47: #{attention_forward.1} parent=1 // pred_check_branch
      %867 = sbr.rel (0) target = $region49
    $region48: #{attention_forward.1} parent=1 // pred_region
      _
    $region49: #{attention_forward.1} parent=1 // pred_fallthru
      _
    // Predicated region
    $region50: #{attention_forward.1} parent=1 // pred_check
      _
    $region51: #{attention_forward.1} parent=1 // pred_check_branch
      %869 = sbr.rel (0) target = $region53
    $region52: #{attention_forward.1} parent=1 // pred_region
      %870 = dma.done [#allocation3], 32
    $region53: #{attention_forward.1} parent=1 // pred_fallthru
      _
    %871 = vsyncpa [#allocation3], 1

</llo_original>
